<compile_context>
chip_gen: v7x
topology: tpu7x:2x2x1
jax: 0.10.0
libtpu: 0.0.40
codegen_flags: <defaults>
</compile_context>

<pallas_src>
import jax
import jax.numpy as jnp
from jax.experimental import pallas as pl
from jax.experimental.pallas import tpu as pltpu


def _round_up(x, m):
    return (x + m - 1) // m * m


def _choose_tiles(R, L, itemsize, byte_cap):
    """Pick (tile_r, tile_l): lane dim as wide as possible first."""
    unit_r = 8 * (4 // itemsize)          # sublane packing: 8 f32 / 16 bf16 / 32 i8
    min_r = min(R, unit_r)
    # Lane dim first: widest tile -> long contiguous DMA bursts.
    if L <= 128 or L * min_r * itemsize <= byte_cap:
        tile_l = L                        # full lane extent (allowed even if ragged)
    else:
        tile_l = max(128, (byte_cap // (itemsize * min_r)) // 128 * 128)
    # Row tile from the remaining byte budget.
    budget_r = max(1, byte_cap // (itemsize * tile_l))
    if R <= budget_r or R <= unit_r:
        tile_r = R                        # full dim always legal
    else:
        tile_r = max(unit_r, budget_r // unit_r * unit_r)
    # v7x megacore: give the "parallel" (row) axis >= 2 steps when possible.
    if pl.cdiv(R, tile_r) == 1 and R >= 2 * unit_r:
        tile_r = _round_up(pl.cdiv(R, 2), unit_r)
    return tile_r, tile_l


def basic_split_loss(input_img, input_flow, target_flow, channels, weights,
                     *, _tile_byte_cap=4 << 20):
    """Weighted sum of per-channel-split MSE losses."""
    del input_img  # elementwise MSE sub-losses ignore the image
    N, C, H, W = input_flow.shape
    assert sum(channels) == C
    assert len(channels) == len(weights)

    R, L = N * C, H * W
    in2 = input_flow.reshape(R, L)        # free reshape, row-major NCHW
    tg2 = target_flow.reshape(R, L)
    itemsize = jnp.dtype(in2.dtype).itemsize

    tile_r, tile_l = _choose_tiles(R, L, itemsize, _tile_byte_cap)
    grid_r = pl.cdiv(R, tile_r)
    grid_l = pl.cdiv(L, tile_l)
    mask_cols = (L % tile_l) != 0         # ragged last column block -> mask in-kernel

    def kernel(in_ref, tgt_ref, out_ref):
        j = pl.program_id(1)              # top-level only (safe in all lowerings)

        @pl.when(j == 0)
        def _init():
            out_ref[...] = jnp.zeros_like(out_ref)

        d = in_ref[...].astype(jnp.float32) - tgt_ref[...].astype(jnp.float32)
        if mask_cols:
            # Mask with a select BEFORE squaring: OOB lanes may hold garbage.
            col = j * tile_l + jax.lax.broadcasted_iota(
                jnp.int32, (tile_r, tile_l), 1)
            d = jnp.where(col < L, d, 0.0)
        # Per-row f32 partial sum accumulates across the column (reduction)
        # axis in the resident (tile_r, 1) output block.
        out_ref[...] += jnp.sum(d * d, axis=-1, keepdims=True)

    cost = pl.CostEstimate(flops=3 * R * L,
                           transcendentals=0,
                           bytes_accessed=2 * R * L * itemsize + R * 4)

    partials = pl.pallas_call(
        kernel,
        out_shape=jax.ShapeDtypeStruct((R, 1), jnp.float32),
        grid=(grid_r, grid_l),
        in_specs=[pl.BlockSpec((tile_r, tile_l), lambda i, j: (i, j)),
                  pl.BlockSpec((tile_r, tile_l), lambda i, j: (i, j))],
        out_specs=pl.BlockSpec((tile_r, 1), lambda i, j: (i, 0)),
        compiler_params=pltpu.CompilerParams(
            dimension_semantics=("parallel", "arbitrary"),
            vmem_limit_bytes=48 << 20),
        cost_estimate=cost,
    )(in2, tg2)

    # Per-row scale weight/numel(split) applied outside the kernel (torch mean
    # semantics): row r -> channel c = r % C -> scale = wt / (N*ch*H*W).
    row_ch = jnp.arange(R, dtype=jnp.int32) % C
    w = jnp.zeros((R,), jnp.float32)
    ch_start = 0
    for ch, wt in zip(channels, weights):
        scale = jnp.float32(float(wt) / float(N * ch * H * W))
        w = jnp.where((row_ch >= ch_start) & (row_ch < ch_start + ch), scale, w)
        ch_start += ch
    return jnp.sum(partials[:, 0] * w)


def _reference_loss(input_flow, target_flow, channels, weights):
    ch_start, ref = 0, jnp.float32(0.0)
    for ch, wt in zip(channels, weights):
        ch_end = ch_start + ch
        d = (input_flow[:, ch_start:ch_end].astype(jnp.float32)
             - target_flow[:, ch_start:ch_end].astype(jnp.float32))
        ref = ref + wt * jnp.mean(d * d)
        ch_start = ch_end
    return ref


if __name__ == "__main__":
    key = jax.random.PRNGKey(0)

    # Case 1: aligned shapes, single-tile grid.
    k1, k2, k3 = jax.random.split(key, 3)
    N, C, H, W = 2, 4, 16, 16
    channels, weights = [2, 2], [1.0, 0.5]
    input_img = jax.random.normal(k1, (N, 3, H, W), jnp.float32)
    in_flow = jax.random.normal(k2, (N, C, H, W), jnp.float32)
    tg_flow = jax.random.normal(k3, (N, C, H, W), jnp.float32)
    loss = basic_split_loss(input_img, in_flow, tg_flow, channels, weights)
    jax.block_until_ready(loss)
    ref = _reference_loss(in_flow, tg_flow, channels, weights)
    assert jnp.allclose(loss, ref, rtol=1e-5, atol=1e-6), (loss, ref)

    # Case 2: ragged shapes (R=3, L=50), full-extent blocks, uneven splits.
    k4, k5 = jax.random.split(k3, 2)
    N2, C2, H2, W2 = 1, 3, 5, 10
    ch2, wt2 = [2, 1], [0.7, 1.3]
    in2 = jax.random.normal(k4, (N2, C2, H2, W2), jnp.float32)
    tg2 = jax.random.normal(k5, (N2, C2, H2, W2), jnp.float32)
    loss2 = basic_split_loss(None, in2, tg2, ch2, wt2)
    jax.block_until_ready(loss2)
    ref2 = _reference_loss(in2, tg2, ch2, wt2)
    assert jnp.allclose(loss2, ref2, rtol=1e-5, atol=1e-6), (loss2, ref2)

    # Case 3: force a multi-tile grid (2 parallel row tiles x 4-step column
    # reduction) via a tiny byte cap to exercise init/accumulate.
    k6, k7 = jax.random.split(k5, 2)
    N3, C3, H3, W3 = 4, 4, 16, 32
    ch3, wt3 = [1, 3], [2.0, 0.25]
    in3 = jax.random.normal(k6, (N3, C3, H3, W3), jnp.float32)
    tg3 = jax.random.normal(k7, (N3, C3, H3, W3), jnp.float32)
    loss3 = basic_split_loss(None, in3, tg3, ch3, wt3,
                             _tile_byte_cap=8 * 128 * 4)
    jax.block_until_ready(loss3)
    ref3 = _reference_loss(in3, tg3, ch3, wt3)
    assert jnp.allclose(loss3, ref3, rtol=1e-5, atol=1e-6), (loss3, ref3)

    # Case 4: ragged lane dim with column tiling (L=270, tile_l=128) -> exercises
    # in-kernel tail masking (no jnp.pad round trip).
    k8, k9 = jax.random.split(k7, 2)
    N4, C4, H4, W4 = 1, 2, 9, 30
    ch4, wt4 = [1, 1], [0.3, 0.9]
    in4 = jax.random.normal(k8, (N4, C4, H4, W4), jnp.float32)
    tg4 = jax.random.normal(k9, (N4, C4, H4, W4), jnp.float32)
    loss4 = basic_split_loss(None, in4, tg4, ch4, wt4, _tile_byte_cap=1024)
    jax.block_until_ready(loss4)
    ref4 = _reference_loss(in4, tg4, ch4, wt4)
    assert jnp.allclose(loss4, ref4, rtol=1e-5, atol=1e-6), (loss4, ref4)

    # Case 5: bf16 inputs (kernel upcasts to f32).
    k10, k11 = jax.random.split(k9, 2)
    in5 = jax.random.normal(k10, (N, C, H, W), jnp.float32).astype(jnp.bfloat16)
    tg5 = jax.random.normal(k11, (N, C, H, W), jnp.float32).astype(jnp.bfloat16)
    loss5 = basic_split_loss(None, in5, tg5, channels, weights)
    jax.block_until_ready(loss5)
    ref5 = _reference_loss(in5, tg5, channels, weights)
    assert jnp.allclose(loss5, ref5, rtol=1e-4, atol=1e-5), (loss5, ref5)

    print("KERNEL_OK")
</pallas_src>

<mosaic_0001>
module attributes {stable_mosaic.version = 11 : i64} {
  func.func @kernel(%arg0: i32, %arg1: i32, %arg2: memref<8x256xf32, #tpu.memory_space<vmem>>, %arg3: memref<8x256xf32, #tpu.memory_space<vmem>>, %arg4: memref<8x1xf32, #tpu.memory_space<vmem>>) attributes {dimension_semantics = [#tpu.dimension_semantics<parallel>, #tpu.dimension_semantics<arbitrary>], iteration_bounds = array<i64: 1, 1>, scalar_prefetch = 0 : i64, scratch_operands = 0 : i64, tpu.core_type = #tpu.core_type<tc>, window_params = [{transform_indices = @transform_0, window_bounds = array<i64: 8, 256>}, {transform_indices = @transform_1, window_bounds = array<i64: 8, 256>}, {transform_indices = @transform_2, window_bounds = array<i64: 8, 1>}]} {
    %c0_i32 = arith.constant 0 : i32
    %0 = arith.cmpi eq, %arg1, %c0_i32 : i32
    %1 = arith.extui %0 : i1 to i32
    %c0_i32_0 = arith.constant 0 : i32
    %2 = arith.cmpi ne, %1, %c0_i32_0 : i32
    scf.if %2 {
      %cst_8 = arith.constant 0.000000e+00 : f32
      %12 = vector.broadcast %cst_8 : f32 to vector<8x1xf32>
      %c0_9 = arith.constant 0 : index
      %c0_10 = arith.constant 0 : index
      %13 = vector.load %arg4[%c0_9, %c0_10] : memref<8x1xf32, #tpu.memory_space<vmem>>, vector<8x1xf32>
      tpu.vector_store %arg4[%c0_9, %c0_10], %12 {strides = array<i32>} : memref<8x1xf32, #tpu.memory_space<vmem>>, vector<8x1xf32>,
    } else {
    }
    %c0 = arith.constant 0 : index
    %c0_1 = arith.constant 0 : index
    %3 = vector.load %arg2[%c0, %c0_1] : memref<8x256xf32, #tpu.memory_space<vmem>>, vector<8x256xf32>
    %c0_2 = arith.constant 0 : index
    %c0_3 = arith.constant 0 : index
    %4 = vector.load %arg3[%c0_2, %c0_3] : memref<8x256xf32, #tpu.memory_space<vmem>>, vector<8x256xf32>
    %5 = arith.subf %3, %4 : vector<8x256xf32>
    %c0_4 = arith.constant 0 : index
    %c0_5 = arith.constant 0 : index
    %6 = vector.load %arg4[%c0_4, %c0_5] : memref<8x1xf32, #tpu.memory_space<vmem>>, vector<8x1xf32>
    %7 = arith.mulf %5, %5 : vector<8x256xf32>
    %cst = arith.constant dense<0.000000e+00> : vector<8xf32>
    %8 = vector.multi_reduction <add>, %7, %cst [1] : vector<8x256xf32> to vector<8xf32>
    %9 = vector.shape_cast %8 : vector<8xf32> to vector<8x1xf32>
    %10 = arith.addf %6, %9 : vector<8x1xf32>
    %c0_6 = arith.constant 0 : index
    %c0_7 = arith.constant 0 : index
    %11 = vector.load %arg4[%c0_6, %c0_7] : memref<8x1xf32, #tpu.memory_space<vmem>>, vector<8x1xf32>
    tpu.vector_store %arg4[%c0_6, %c0_7], %10 {strides = array<i32>} : memref<8x1xf32, #tpu.memory_space<vmem>>, vector<8x1xf32>,
    return
  }
  func.func @transform_0(%arg0: i32, %arg1: i32) -> (i32, i32) {
    %c0_i32 = arith.constant 0 : i32
    return %arg0, %arg1 : i32, i32
  }
  func.func @transform_1(%arg0: i32, %arg1: i32) -> (i32, i32) {
    %c0_i32 = arith.constant 0 : i32
    return %arg0, %arg1 : i32, i32
  }
  func.func @transform_2(%arg0: i32, %arg1: i32) -> (i32, i32) {
    %c0_i32 = arith.constant 0 : i32
    %c0_i32_0 = arith.constant 0 : i32
    return %arg0, %c0_i32 : i32, i32
  }
}

</mosaic_0001>

<llo_original>
// kernel: tpu_custom_call.1
$region0: #{tpu_custom_call.1}
  #allocation0 [shape = 'u32[]', space=smem, size = 0x4, offset = 0x4, fixed_abs, tag = 'smem constant byte address 0x4 - core index']
  #allocation1 [shape = 'u32[144,128]{1,0:T(1,128)}', space=vmem, size = 0x12000, scoped, tag = 'internal scratch']
  %s0 = inlined_call_operand.hbm [shape: f32[8,256], index: 0, kind: input, shape index: {}]
  %s1 = inlined_call_operand.hbm [shape: f32[8,256], index: 1, kind: input, shape index: {}]
  %s2 = inlined_call_operand.vmem [shape: f32[8,1], index: 2, kind: output, shape index: {}]
  %s3 = sld [smem:[#allocation0]]
  $region30: #{tpu_custom_call.1} parent=0
    _
  %s5 = ssub.s32 1, %s3
  %s6 = scalar_select 0, %s5, %s3
  $region1: #{tpu_custom_call.1} parent=0
    #allocation2 [shape = 'u8[8192]{0}', space=vmem, size = 0x2000, scoped, tag = 'input window, operand 0, single buffered']
    #allocation3 [shape = 's32[1]{0}', space=sflag, size = 0x4, scoped, tag = 'scoped memory for tpu_custom_call.1']
    #allocation4 [shape = 'u8[8192]{0}', space=vmem, size = 0x2000, scoped, tag = 'input window, operand 1, single buffered']
    #allocation5 [shape = 's32[1]{0}', space=sflag, size = 0x4, scoped, tag = 'scoped memory for tpu_custom_call.1']
    %7 = vsyncpa [#allocation3], 0
    %8 = vsyncpa [#allocation5], 0
    // Predicated region
    $region2: #{tpu_custom_call.1} parent=1 // pred_check
      _
    $region3: #{tpu_custom_call.1} parent=1 // pred_check_branch
      %10 = sbr.rel (0) target = $region5
    $region4: #{tpu_custom_call.1} parent=1 // pred_region
      %s12 = ssub.s32 256, 256
      %13 = vsyncadd [#allocation3], %s12
      %s15 = sshll.u32 [#allocation2], 4
      %s16 = int_to_ptr.vmem [resolvable:$true] %s15
      %18 = dma.hbm_to_vmem [thread:$0]  %s0, 256, %s16, [#allocation3]
    $region5: #{tpu_custom_call.1} parent=1 // pred_fallthru
      _
    // Predicated region
    $region6: #{tpu_custom_call.1} parent=1 // pred_check
      _
    $region7: #{tpu_custom_call.1} parent=1 // pred_check_branch
      %20 = sbr.rel (0) target = $region9
    $region8: #{tpu_custom_call.1} parent=1 // pred_region
      %s22 = ssub.s32 256, 256
      %23 = vsyncadd [#allocation5], %s22
      %s25 = sshll.u32 [#allocation4], 4
      %s26 = int_to_ptr.vmem [resolvable:$true] %s25
      %28 = dma.hbm_to_vmem [thread:$0]  %s1, 256, %s26, [#allocation5]
    $region9: #{tpu_custom_call.1} parent=1 // pred_fallthru
      _
    // Predicated region
    $region10: #{tpu_custom_call.1} parent=1 // pred_check
      _
    $region11: #{tpu_custom_call.1} parent=1 // pred_check_branch
      %30 = sbr.rel (0) target = $region13
    $region12: #{tpu_custom_call.1} parent=1 // pred_region
      %31 = dma.done [#allocation3], 256
    $region13: #{tpu_custom_call.1} parent=1 // pred_fallthru
      _
    // Predicated region
    $region14: #{tpu_custom_call.1} parent=1 // pred_check
      _
    $region15: #{tpu_custom_call.1} parent=1 // pred_check_branch
      %33 = sbr.rel (0) target = $region17
    $region16: #{tpu_custom_call.1} parent=1 // pred_region
      %34 = dma.done [#allocation5], 256
    $region17: #{tpu_custom_call.1} parent=1 // pred_fallthru
      _
    %p35 = scmp.eq.s32.totalorder 0, 0
    // Predicated region
    $region18: #{tpu_custom_call.1} parent=1 // pred_check
      %p36 = pneg %p35
    $region19: #{tpu_custom_call.1} parent=1 // pred_check_branch
      %38 = sbr.rel (%p36) target = $region21
    $region20: #{tpu_custom_call.1} parent=1 // pred_region
      %vm39 = vcmask 7168
      %40 = vst.msk [vmem:[%s2] sm:$0xff] %vm39, 0.0
    $region21: #{tpu_custom_call.1} parent=1 // pred_fallthru
      _
    %v41 = vld [vmem:[#allocation2] sm:$0xff]
    %v42 = vld [vmem:[#allocation2 + $0x8] sm:$0xff]
    %v43 = vld [vmem:[#allocation4] sm:$0xff]
    %v44 = vld [vmem:[#allocation4 + $0x8] sm:$0xff]
    %v45 = vsub.f32 %v41, %v43
    %v46 = vsub.f32 %v42, %v44
    %v47 = vld [vmem:[%s2] sm:$0xff]
    %v48 = vmul.f32 %v45, %v45
    %v49 = vmul.f32 %v46, %v46
    %v50 = vadd.f32 %v48, %v49
    %51 = vadd.xlane.f32.xlu0 %v50
    %v52 = vpop.xlane.xlu0 %51
    %v53 = vadd.f32 %v47, %v52
    %vm54 = vcmask 7168
    %55 = vst.msk [vmem:[%s2] sm:$0xff] %vm54, %v53
    // Predicated region
    $region22: #{tpu_custom_call.1} parent=1 // pred_check
      _
    $region23: #{tpu_custom_call.1} parent=1 // pred_check_branch
      %57 = sbr.rel (0) target = $region25
    $region24: #{tpu_custom_call.1} parent=1 // pred_region
      _
    $region25: #{tpu_custom_call.1} parent=1 // pred_fallthru
      _
    // Predicated region
    $region26: #{tpu_custom_call.1} parent=1 // pred_check
      _
    $region27: #{tpu_custom_call.1} parent=1 // pred_check_branch
      %59 = sbr.rel (0) target = $region29
    $region28: #{tpu_custom_call.1} parent=1 // pred_region
      _
    $region29: #{tpu_custom_call.1} parent=1 // pred_fallthru
      _
    %60 = vsyncpa [#allocation3], 1
    %61 = vsyncpa [#allocation5], 1

</llo_original>
